<compile_context>
chip_gen: v6e
topology: v6e:2x2x1
jax: 0.10.0
libtpu: 0.0.40
codegen_flags: <defaults>
</compile_context>

<pallas_src>
import math
from functools import partial

import numpy as np
import jax
import jax.numpy as jnp
from jax import lax
from jax.experimental import pallas as pl
from jax.experimental.pallas import tpu as pltpu

BN_EPS = 1e-5          # PyTorch BatchNorm1d default
LEAKY_SLOPE = 0.2      # LeakyReLU(0.2)


def _reflect_index(i, pad, length):
    """Map padded index i ('reflect' mode, no edge repeat) to a source index."""
    src = i - pad
    if src < 0:
        src = -src
    elif src >= length:
        src = 2 * (length - 1) - src
    return src


def _aa_filter(filt_size):
    """AADownsample triangular filter, e.g. k=3 -> [0.25, 0.5, 0.25]."""
    ha = np.arange(1, filt_size // 2 + 2, dtype=np.float32)
    a = np.concatenate([ha, ha[::-1][1:]])
    return a / a.sum()


def _down_kernel(xcol_ref, w_ref, shift_ref, o_ref, *, slice_starts, filt_taps, lout):
    """One batch element per program.

    xcol_ref:  (1, kk*C, Lp2) bf16  phase-major im2col (both reflect pads folded in)
    w_ref:     (2C, kk*C)     bf16  conv taps flattened, BN scale folded in
    shift_ref: (2C, 1)        f32   folded BN shift
    o_ref:     (1, 2C, Lout)        output
    """
    # Conv: all kk taps fused into one MXU matmul, f32 accumulation.
    y = jnp.dot(w_ref[...], xcol_ref[0], preferred_element_type=jnp.float32)  # (2C, Lp2)
    y = y + shift_ref[...]                       # BatchNorm shift (eval mode)
    y = jnp.where(y >= 0, y, LEAKY_SLOPE * y)    # LeakyReLU(0.2), f32 on the VPU
    # Anti-aliased stride-d downsample: the phase-major column order turns every
    # filter tap into a contiguous static lane slice -> T fused multiply-adds.
    s0 = slice_starts[0]
    acc = filt_taps[0] * y[:, s0:s0 + lout]
    for t in range(1, len(filt_taps)):           # tiny static loop (len(filt) taps)
        s = slice_starts[t]
        acc = acc + filt_taps[t] * y[:, s:s + lout]
    o_ref[0] = acc.astype(o_ref.dtype)


def down_forward(x, conv_w, bn_gamma, bn_beta, bn_mean, bn_var, *, d=2, k=3,
                 mxu_dtype=jnp.bfloat16):
    """Pallas implementation of Down.forward. x: (B, C, L) -> (B, 2C, Lout)."""
    B, C, L = x.shape
    C2 = conv_w.shape[0]
    kk = d + 1
    pad1 = kk // 2
    Lconv = L + 2 * pad1 - kk + 1
    filt = _aa_filter(k)
    T = len(filt)
    pad2 = k // 2
    Lp2 = Lconv + 2 * pad2
    Lout = (Lp2 - T) // d + 1

    # ---- host-side (numpy) index bookkeeping: all O(L), no dense operators ----
    # Phase-major ordering of the (AA-reflect-padded) conv-output positions m=0..Lp2-1.
    perm, off = [], []
    for r in range(d):
        off.append(len(perm))
        perm.extend(range(r, Lp2, d))
    # Source conv-output column for each position (AADownsample reflect pad folded in).
    src = np.array([_reflect_index(m, pad2, Lconv) for m in perm], dtype=np.int32)
    # Per-tap im2col column indices into the ReflectionPad1d(pad1)-padded input.
    col_idx = src[None, :] + np.arange(kk, dtype=np.int32)[:, None]        # (kk, Lp2)
    # AA filter tap -> contiguous slice start in the phase-major layout.
    slice_starts = tuple(int(off[t % d] + t // d) for t in range(T))
    filt_taps = tuple(float(v) for v in filt)

    # ---- operand prep (cheap, linear-size XLA ops) ----
    x_pad1 = jnp.pad(x, ((0, 0), (0, 0), (pad1, pad1)), mode='reflect')
    cols = x_pad1[:, :, jnp.asarray(col_idx)]                 # (B, C, kk, Lp2)
    x_col = cols.transpose(0, 2, 1, 3).reshape(B, kk * C, Lp2).astype(mxu_dtype)

    scale = (bn_gamma * lax.rsqrt(bn_var + BN_EPS)).astype(jnp.float32)
    shift = (bn_beta.astype(jnp.float32) - bn_mean * scale).reshape(C2, 1)
    w_flat = (jnp.transpose(conv_w, (0, 2, 1)).reshape(C2, kk * C).astype(jnp.float32)
              * scale[:, None]).astype(mxu_dtype)             # BN scale folded into W

    kernel = partial(_down_kernel, slice_starts=slice_starts,
                     filt_taps=filt_taps, lout=Lout)

    isz = np.dtype(mxu_dtype).itemsize
    osz = np.dtype(x.dtype).itemsize
    block_bytes = kk * C * Lp2 * isz + C2 * Lout * osz        # per-program in/out tile
    vmem_limit = int(min(max(8 * block_bytes + C2 * kk * C * isz + (1 << 20),
                             16 << 20), 64 << 20))
    cost = pl.CostEstimate(
        flops=int(2 * B * C2 * kk * C * Lp2 + 6 * B * C2 * Lp2 + 2 * T * B * C2 * Lout),
        transcendentals=0,
        bytes_accessed=int(x_col.size * isz + w_flat.size * isz + shift.size * 4
                           + B * C2 * Lout * osz))

    return pl.pallas_call(
        kernel,
        out_shape=jax.ShapeDtypeStruct((B, C2, Lout), x.dtype),
        grid=(B,),
        in_specs=[
            pl.BlockSpec((1, kk * C, Lp2), lambda b: (b, 0, 0)),   # per-batch im2col
            pl.BlockSpec((C2, kk * C), lambda b: (0, 0)),          # weights, resident
            pl.BlockSpec((C2, 1), lambda b: (0, 0)),               # BN shift, resident
        ],
        out_specs=pl.BlockSpec((1, C2, Lout), lambda b: (b, 0, 0)),
        compiler_params=pltpu.CompilerParams(
            dimension_semantics=("parallel",),
            vmem_limit_bytes=vmem_limit),
        cost_estimate=cost,
    )(x_col, w_flat, shift)


def down_reference(x, conv_w, bn_gamma, bn_beta, bn_mean, bn_var, *, d=2, k=3):
    """Pure-JAX reference mirroring the PyTorch module (BatchNorm in eval mode)."""
    C2 = conv_w.shape[0]
    kk = d + 1
    xp = jnp.pad(x, ((0, 0), (0, 0), (kk // 2, kk // 2)), mode='reflect')
    y = lax.conv_general_dilated(xp, conv_w, window_strides=(1,), padding='VALID',
                                 dimension_numbers=('NCH', 'OIH', 'NCH'),
                                 precision=lax.Precision.HIGHEST)
    inv = lax.rsqrt(bn_var + BN_EPS)
    y = (y - bn_mean[None, :, None]) * inv[None, :, None] * bn_gamma[None, :, None] \
        + bn_beta[None, :, None]
    y = jnp.where(y >= 0, y, LEAKY_SLOPE * y)
    w_aa = jnp.tile(jnp.asarray(_aa_filter(k))[None, None, :], (C2, 1, 1))
    yp = jnp.pad(y, ((0, 0), (0, 0), (k // 2, k // 2)), mode='reflect')
    return lax.conv_general_dilated(yp, w_aa, window_strides=(d,), padding='VALID',
                                    dimension_numbers=('NCH', 'OIH', 'NCH'),
                                    feature_group_count=C2,
                                    precision=lax.Precision.HIGHEST)


if __name__ == "__main__":
    B, C, L = 2, 4, 16
    d, k = 2, 3
    C2, kk = 2 * C, d + 1

    key = jax.random.PRNGKey(0)
    kx, kw, kg, kb, km, kv = jax.random.split(key, 6)
    x = jax.random.normal(kx, (B, C, L), dtype=jnp.float32)
    conv_w = jax.random.normal(kw, (C2, C, kk), dtype=jnp.float32) / math.sqrt(C * kk)
    bn_gamma = 1.0 + 0.1 * jax.random.normal(kg, (C2,), dtype=jnp.float32)
    bn_beta = 0.1 * jax.random.normal(kb, (C2,), dtype=jnp.float32)
    bn_mean = 0.1 * jax.random.normal(km, (C2,), dtype=jnp.float32)
    bn_var = 1.0 + 0.1 * jax.random.uniform(kv, (C2,), dtype=jnp.float32)

    out = down_forward(x, conv_w, bn_gamma, bn_beta, bn_mean, bn_var, d=d, k=k)
    out = jax.block_until_ready(out)

    ref = down_reference(x, conv_w, bn_gamma, bn_beta, bn_mean, bn_var, d=d, k=k)
    ref = jax.block_until_ready(ref)

    assert out.shape == (B, C2, L // 2), out.shape
    assert bool(jnp.all(jnp.isfinite(out)))
    # Kernel feeds the MXU bf16 operands (f32 accumulation); reference is f32/HIGHEST,
    # so allow bf16-level input-quantization error.
    assert bool(jnp.allclose(out, ref, atol=2e-2, rtol=2e-2)), \
        float(jnp.max(jnp.abs(out - ref)))
    print("KERNEL_OK")
</pallas_src>

<mosaic_0001>
module attributes {stable_mosaic.version = 11 : i64} {
  func.func @_down_kernel(%arg0: i32, %arg1: memref<1x12x18xbf16, #tpu.memory_space<vmem>>, %arg2: memref<8x12xbf16, #tpu.memory_space<vmem>>, %arg3: memref<8x1xf32, #tpu.memory_space<vmem>>, %arg4: memref<1x8x8xf32, #tpu.memory_space<vmem>>) attributes {dimension_semantics = [#tpu.dimension_semantics<parallel>], iteration_bounds = array<i64: 2>, scalar_prefetch = 0 : i64, scratch_operands = 0 : i64, tpu.core_type = #tpu.core_type<tc>, window_params = [{transform_indices = @transform_0, window_bounds = array<i64: 1, 12, 18>}, {pipeline_mode = #tpu.pipeline_mode<synchronous>, transform_indices = @transform_1, window_bounds = array<i64: 8, 12>}, {pipeline_mode = #tpu.pipeline_mode<synchronous>, transform_indices = @transform_2, window_bounds = array<i64: 8, 1>}, {transform_indices = @transform_3, window_bounds = array<i64: 1, 8, 8>}]} {
    %c0 = arith.constant 0 : index
    %c0_0 = arith.constant 0 : index
    %0 = vector.load %arg2[%c0, %c0_0] : memref<8x12xbf16, #tpu.memory_space<vmem>>, vector<8x12xbf16>
    %c0_1 = arith.constant 0 : index
    %c0_2 = arith.constant 0 : index
    %c0_3 = arith.constant 0 : index
    %1 = vector.load %arg1[%c0_1, %c0_2, %c0_3] : memref<1x12x18xbf16, #tpu.memory_space<vmem>>, vector<1x12x18xbf16>
    %2 = vector.shape_cast %1 : vector<1x12x18xbf16> to vector<12x18xbf16>
    %cst = arith.constant dense<0.000000e+00> : vector<8x18xf32>
    %3 = tpu.matmul %0, %2, %cst {dimension_numbers = #tpu.dot_dimension_numbers<[1], [0], [0], [1], [0, 0, 1, 1], [], []>} : vector<8x12xbf16>, vector<12x18xbf16>, vector<8x18xf32> -> vector<8x18xf32>
    %c0_4 = arith.constant 0 : index
    %c0_5 = arith.constant 0 : index
    %4 = vector.load %arg3[%c0_4, %c0_5] : memref<8x1xf32, #tpu.memory_space<vmem>>, vector<8x1xf32>
    %5 = vector.broadcast %4 : vector<8x1xf32> to vector<8x18xf32>
    %6 = arith.addf %3, %5 : vector<8x18xf32>
    %cst_6 = arith.constant 0.000000e+00 : f32
    %7 = vector.broadcast %cst_6 : f32 to vector<8x18xf32>
    %8 = arith.cmpf oge, %6, %7 : vector<8x18xf32>
    %cst_7 = arith.constant 2.000000e-01 : f32
    %9 = vector.broadcast %cst_7 : f32 to vector<8x18xf32>
    %10 = arith.mulf %9, %6 : vector<8x18xf32>
    %11 = arith.select %8, %6, %10 : vector<8x18xi1>, vector<8x18xf32>
    %12 = vector.extract_strided_slice %11 {offsets = [0, 0], sizes = [8, 8], strides = [1, 1]} : vector<8x18xf32> to vector<8x8xf32>
    %cst_8 = arith.constant 2.500000e-01 : f32
    %13 = vector.broadcast %cst_8 : f32 to vector<8x8xf32>
    %14 = arith.mulf %13, %12 : vector<8x8xf32>
    %15 = vector.extract_strided_slice %11 {offsets = [0, 9], sizes = [8, 8], strides = [1, 1]} : vector<8x18xf32> to vector<8x8xf32>
    %cst_9 = arith.constant 5.000000e-01 : f32
    %16 = vector.broadcast %cst_9 : f32 to vector<8x8xf32>
    %17 = arith.mulf %16, %15 : vector<8x8xf32>
    %18 = arith.addf %14, %17 : vector<8x8xf32>
    %19 = vector.extract_strided_slice %11 {offsets = [0, 1], sizes = [8, 8], strides = [1, 1]} : vector<8x18xf32> to vector<8x8xf32>
    %cst_10 = arith.constant 2.500000e-01 : f32
    %20 = vector.broadcast %cst_10 : f32 to vector<8x8xf32>
    %21 = arith.mulf %20, %19 : vector<8x8xf32>
    %22 = arith.addf %18, %21 : vector<8x8xf32>
    %c0_11 = arith.constant 0 : index
    %c0_12 = arith.constant 0 : index
    %c0_13 = arith.constant 0 : index
    %23 = vector.load %arg4[%c0_11, %c0_12, %c0_13] : memref<1x8x8xf32, #tpu.memory_space<vmem>>, vector<1x8x8xf32>
    %24 = vector.shape_cast %23 : vector<1x8x8xf32> to vector<8x8xf32>
    %25 = vector.shape_cast %22 : vector<8x8xf32> to vector<1x8x8xf32>
    tpu.vector_store %arg4[%c0_11, %c0_12, %c0_13], %25 {strides = array<i32>} : memref<1x8x8xf32, #tpu.memory_space<vmem>>, vector<1x8x8xf32>,
    return
  }
  func.func @transform_0(%arg0: i32) -> (i32, i32, i32) {
    %c0_i32 = arith.constant 0 : i32
    %c0_i32_0 = arith.constant 0 : i32
    %c0_i32_1 = arith.constant 0 : i32
    return %arg0, %c0_i32, %c0_i32_0 : i32, i32, i32
  }
  func.func @transform_1(%arg0: i32) -> (i32, i32) {
    %c0_i32 = arith.constant 0 : i32
    %c0_i32_0 = arith.constant 0 : i32
    %c0_i32_1 = arith.constant 0 : i32
    return %c0_i32, %c0_i32_0 : i32, i32
  }
  func.func @transform_2(%arg0: i32) -> (i32, i32) {
    %c0_i32 = arith.constant 0 : i32
    %c0_i32_0 = arith.constant 0 : i32
    %c0_i32_1 = arith.constant 0 : i32
    return %c0_i32, %c0_i32_0 : i32, i32
  }
  func.func @transform_3(%arg0: i32) -> (i32, i32, i32) {
    %c0_i32 = arith.constant 0 : i32
    %c0_i32_0 = arith.constant 0 : i32
    %c0_i32_1 = arith.constant 0 : i32
    return %arg0, %c0_i32, %c0_i32_0 : i32, i32, i32
  }
}

</mosaic_0001>

<llo_original>
// kernel: tpu_custom_call.1
$region0: #{tpu_custom_call.1}
  #allocation0 [shape = 'u32[]', space=smem, size = 0x4, offset = 0x4, fixed_abs, tag = 'smem constant byte address 0x4 - core index']
  #allocation1 [shape = 'u32[144,128]{1,0:T(1,128)}', space=vmem, size = 0x12000, scoped, tag = 'internal scratch']
  %s0 = inlined_call_operand.vmem [shape: bf16[2,12,18], index: 0, kind: input, shape index: {}]
  %s1 = inlined_call_operand.vmem [shape: bf16[8,12], index: 1, kind: input, shape index: {}]
  %s2 = inlined_call_operand.vmem [shape: f32[8,1], index: 2, kind: input, shape index: {}]
  %s3 = inlined_call_operand.hbm [shape: f32[2,8,8], index: 3, kind: output, shape index: {}]
  %s4 = sld [smem:[#allocation0]]
  $region45: #{tpu_custom_call.1} parent=0
    _
  %s6 = ssub.s32 1, %s4
  %s7 = scalar_select 0, %s6, %s4
  $region1: #{tpu_custom_call.1} parent=0
    #allocation2 [shape = 'u8[8192]{0}', space=vmem, size = 0x2000, scoped, tag = 'output window, operand 0']
    #allocation3 [shape = 's32[2]{0}', space=sflag, size = 0x8, scoped, tag = 'scoped memory for tpu_custom_call.1']
    %8 = vsyncpa [#allocation3], 0
    %s9 = scalar_lea.sflag [#allocation3], 1
    %10 = vsyncpa %s9, 0
    loop: start=0, step=1, limit=4
    $region2: #{tpu_custom_call.1} parent=1 // loop_pre_header
      _
    $region3: #{tpu_custom_call.1} parent=1 // loop_header
      %s12 = sphi 0, %s16
      %p13 = scmp.ge.s32.totalorder %s12, 4
      %s22 = sphi 0, %s24
      %s25 = sphi 0, %s22
      %s26 = sphi 0, %s25
      %s42 = sphi 0, %s26
      %s46 = sphi 0, %s46
      %s48 = sphi 0, %s46
      %s49 = sphi 0, %s48
      %s63 = sphi 0, %s49
      %s67 = sphi 0, %s67
      %s69 = sphi 0, %s67
      %s70 = sphi 0, %s69
      %s84 = sphi 0, %s70
      %s90 = sphi 0, %s92
      %s93 = sphi 0, %s90
      %s94 = sphi 0, %s93
      %s110 = sphi 0, %s94
    $region4: #{tpu_custom_call.1} parent=1 // loop_header_branch
      %15 = sbr.rel (%p13) target = $region8
    $region5: #{tpu_custom_call.1} parent=1 // loop_body
      %s17 = ssub.s32 %s12, 1
      %s18 = ssub.s32 %s12, 2
      %s19 = sadd.s32 %s12, 1
      %s20 = ssub.s32 %s12, %s19
      %p21 = scmp.eq.s32.totalorder %s20, 0
      %s23 = sadd.s32 %s22, 1
      %s24 = scalar_select %p21, %s22, %s23
      %p27 = pneg %p21
      %p28 = scmp.eq.s32.totalorder %s12, 1
      %p29 = por %p27, %p28
      %p30 = scmp.ne.s32.totalorder %s22, %s25
      %p31 = scmp.eq.s32.totalorder %s12, 0
      %p32 = por %p30, %p31
      %p33 = scmp.ne.s32.totalorder %s22, %s25
      %p34 = scmp.eq.s32.totalorder %s17, 1
      %p35 = por %p33, %p34
      %p36 = scmp.ne.s32.totalorder %s25, %s26
      %p37 = scmp.eq.s32.totalorder %s17, 0
      %p38 = por %p36, %p37
      %p39 = scmp.ne.s32.totalorder %s25, %s26
      %p40 = scmp.eq.s32.totalorder %s18, 1
      %p41 = por %p39, %p40
      %p43 = scmp.ne.s32.totalorder %s26, %s42
      %p44 = scmp.eq.s32.totalorder %s18, 0
      %p45 = por %p43, %p44
      %s47 = sadd.s32 %s46, 1
      %p50 = scmp.eq.s32.totalorder %s12, 1
      %p51 = scmp.ne.s32.totalorder %s46, %s48
      %p52 = scmp.eq.s32.totalorder %s12, 0
      %p53 = por %p51, %p52
      %p54 = scmp.ne.s32.totalorder %s46, %s48
      %p55 = scmp.eq.s32.totalorder %s17, 1
      %p56 = por %p54, %p55
      %p57 = scmp.ne.s32.totalorder %s48, %s49
      %p58 = scmp.eq.s32.totalorder %s17, 0
      %p59 = por %p57, %p58
      %p60 = scmp.ne.s32.totalorder %s48, %s49
      %p61 = scmp.eq.s32.totalorder %s18, 1
      %p62 = por %p60, %p61
      %p64 = scmp.ne.s32.totalorder %s49, %s63
      %p65 = scmp.eq.s32.totalorder %s18, 0
      %p66 = por %p64, %p65
      %s68 = sadd.s32 %s67, 1
      %p71 = scmp.eq.s32.totalorder %s12, 1
      %p72 = scmp.ne.s32.totalorder %s67, %s69
      %p73 = scmp.eq.s32.totalorder %s12, 0
      %p74 = por %p72, %p73
      %p75 = scmp.ne.s32.totalorder %s67, %s69
      %p76 = scmp.eq.s32.totalorder %s17, 1
      %p77 = por %p75, %p76
      %p78 = scmp.ne.s32.totalorder %s69, %s70
      %p79 = scmp.eq.s32.totalorder %s17, 0
      %p80 = por %p78, %p79
      %p81 = scmp.ne.s32.totalorder %s69, %s70
      %p82 = scmp.eq.s32.totalorder %s18, 1
      %p83 = por %p81, %p82
      %p85 = scmp.ne.s32.totalorder %s70, %s84
      %p86 = scmp.eq.s32.totalorder %s18, 0
      %p87 = por %p85, %p86
      %s88 = ssub.s32 %s12, %s19
      %p89 = scmp.eq.s32.totalorder %s88, 0
      %s91 = sadd.s32 %s90, 1
      %s92 = scalar_select %p89, %s90, %s91
      %p95 = pneg %p89
      %p96 = scmp.eq.s32.totalorder %s12, 1
      %p97 = por %p95, %p96
      %p98 = scmp.ne.s32.totalorder %s90, %s93
      %p99 = scmp.eq.s32.totalorder %s12, 0
      %p100 = por %p98, %p99
      %p101 = scmp.ne.s32.totalorder %s90, %s93
      %p102 = scmp.eq.s32.totalorder %s17, 1
      %p103 = por %p101, %p102
      %p104 = scmp.ne.s32.totalorder %s93, %s94
      %p105 = scmp.eq.s32.totalorder %s17, 0
      %p106 = por %p104, %p105
      %p107 = scmp.ne.s32.totalorder %s93, %s94
      %p108 = scmp.eq.s32.totalorder %s18, 1
      %p109 = por %p107, %p108
      %p111 = scmp.ne.s32.totalorder %s94, %s110
      %p112 = scmp.eq.s32.totalorder %s18, 0
      %p113 = por %p111, %p112
      %p114 = scmp.le.s32.totalorder 1, %s12
      %p115 = scmp.lt.s32.totalorder %s12, 3
      %p116 = pnand %p114, %p115
      %p117 = pneg %p116
      // Predicated region
      $region9: #{tpu_custom_call.1} parent=5 // pred_check
        _
      $region10: #{tpu_custom_call.1} parent=5 // pred_check_branch
        %119 = sbr.rel (%p116) target = $region12
      $region11: #{tpu_custom_call.1} parent=5 // pred_region
        %s120 = ssub.s32 %s12, 1
        // Predicated region
        $region13: #{tpu_custom_call.1} parent=11 // pred_check
          %p121 = pneg %p59
        $region14: #{tpu_custom_call.1} parent=11 // pred_check_branch
          %123 = sbr.rel (%p121) target = $region16
        $region15: #{tpu_custom_call.1} parent=11 // pred_region
          _
        $region16: #{tpu_custom_call.1} parent=11 // pred_fallthru
          _
        // Predicated region
        $region17: #{tpu_custom_call.1} parent=11 // pred_check
          %p124 = pneg %p80
        $region18: #{tpu_custom_call.1} parent=11 // pred_check_branch
          %126 = sbr.rel (%p124) target = $region20
        $region19: #{tpu_custom_call.1} parent=11 // pred_region
          _
        $region20: #{tpu_custom_call.1} parent=11 // pred_fallthru
          _
      $region12: #{tpu_custom_call.1} parent=5 // pred_fallthru
        _
      %p127 = scmp.lt.s32.totalorder %s12, 2
      // Predicated region
      $region21: #{tpu_custom_call.1} parent=5 // pred_check
        %p128 = pneg %p127
      $region22: #{tpu_custom_call.1} parent=5 // pred_check_branch
        %130 = sbr.rel (%p128) target = $region24
      $region23: #{tpu_custom_call.1} parent=5 // pred_region
        // Predicated region
        $region25: #{tpu_custom_call.1} parent=23 // pred_check
          %p131 = pneg %p32
        $region26: #{tpu_custom_call.1} parent=23 // pred_check_branch
          %133 = sbr.rel (%p131) target = $region28
        $region27: #{tpu_custom_call.1} parent=23 // pred_region
          %p134 = scmp.lt.s32.totalorder %s12, 1
          %s135 = scalar_select %p134, %s12, 1
          %s136 = smul.addr %s135, 2
          %s137 = smul.addr %s136, 4
          %s138 = scalar_lea.vmem %s0, %s137
        $region28: #{tpu_custom_call.1} parent=23 // pred_fallthru
          _
      $region24: #{tpu_custom_call.1} parent=5 // pred_fallthru
        _
      %p139 = scmp.le.s32.totalorder 1, %s12
      %p140 = scmp.lt.s32.totalorder %s12, 3
      %p141 = pnand %p139, %p140
      %p142 = pneg %p141
      // Predicated region
      $region29: #{tpu_custom_call.1} parent=5 // pred_check
        _
      $region30: #{tpu_custom_call.1} parent=5 // pred_check_branch
        %144 = sbr.rel (%p141) target = $region32
      $region31: #{tpu_custom_call.1} parent=5 // pred_region
        %s145 = ssub.s32 %s12, 1
        %p146 = scmp.lt.s32.totalorder %s17, 1
        %s147 = scalar_select %p146, %s17, 1
        %s148 = smul.addr %s147, 2
        %s149 = smul.addr %s148, 4
        %s150 = scalar_lea.vmem %s0, %s149
        %p151 = pneg %p38
        %p152 = pneg %p35
        %p153 = pneg %p59
        %p154 = pneg %p56
        %p155 = pneg %p80
        %p156 = pneg %p77
        %p157 = pneg %p106
        %p158 = pneg %p103
        %s159 = sand.u32 %s93, 1
        %s160 = scalar_lea.sflag [#allocation3], %s159
        %s161 = sand.u32 %s93, 1
        %s162 = smul.addr %s161, 8
        %s163 = scalar_lea.vmem [#allocation2], %s162
        %p164 = scmp.lt.s32.totalorder %s17, 1
        %s165 = scalar_select %p164, %s17, 1
        %s166 = smul.addr %s165, 2
        %s167 = smul.addr %s166, 4
        %s168 = scalar_lea.vmem %s0, %s167
        %v170 = vld [vmem:[%s1] sm:$0xf]
        %v171 = vld [vmem:[%s168] sm:$0xf]
        %v172 = vld [vmem:[%s168 + $0x4] sm:$0x3]
        %v173 = vld [vmem:[%s2] sm:$0xff]
        %175 = vset.pattern.permute.xlu0 0
        %176 = vperm.xlu0 %175, %v173
        %v177 = vpop.permute.xlu0 %176
        %v181 = vunpack.c.l.b16 %v171
        %v182 = vunpack.c.l.b16 %v172
        %v183 = vpack.c.b16 %v182, %v181
        %vm184 = vcmask 97280
        %v186 = vsel %vm184, %v170, 0
        %vm188 = vcmask 1045504
        %v190 = vsel %vm188, %v183, 0
        %192 = vmatprep.subr.bf16.mxu0 0
        %193 = vmatpush1.bf16.msra.mxu0 0
        %194 = vmatprep.subr.bf16.mxu0 0
        %195 = vmatpush1.bf16.msra.mxu0 0
        %196 = vmatprep.subr.bf16.mxu0 0
        %197 = vmatpush1.bf16.msra.mxu0 0
        %198 = vmatprep.subr.bf16.mxu0 0
        %199 = vmatpush1.bf16.msra.mxu0 0
        %200 = vmatprep.subr.bf16.mxu0 0
        %201 = vmatpush1.bf16.msra.mxu0 0
        %202 = vmatprep.subr.bf16.mxu0 0
        %203 = vmatpush1.bf16.msra.mxu0 0
        %204 = vmatprep.subr.bf16.mxu0 0
        %205 = vmatpush1.bf16.msra.mxu0 0
        %206 = vmatprep.subr.bf16.mxu0 0
        %207 = vmatpush1.bf16.msra.mxu0 %v190
        %208 = vmatprep.subr.bf16.mxu0 0
        %209 = vmatpush2.bf16.msra.mxu0 0
        %210 = vmatprep.subr.bf16.mxu0 0
        %211 = vmatpush2.bf16.msra.mxu0 0
        %212 = vmatprep.subr.bf16.mxu0 0
        %213 = vmatpush2.bf16.msra.mxu0 0
        %214 = vmatprep.subr.bf16.mxu0 0
        %215 = vmatpush2.bf16.msra.mxu0 0
        %216 = vmatprep.subr.bf16.mxu0 0
        %217 = vmatpush2.bf16.msra.mxu0 0
        %218 = vmatprep.subr.bf16.mxu0 0
        %219 = vmatpush2.bf16.msra.mxu0 0
        %220 = vmatprep.subr.bf16.mxu0 0
        %221 = vmatpush2.bf16.msra.mxu0 0
        %222 = vmatprep.subr.bf16.mxu0 0
        %223 = vmatpush2.bf16.msra.mxu0 0
        %224 = vmatprep.mubr.bf16.mxu0 0
        %225 = vmatmul.mubr.bf16.gmra.mxu0 %v186
        %v226 = vpop.f32.mrf.mxu0
        %v227 = vadd.f32 %v177, %v226
        %v228 = vpop.f32.mrf.mxu0
        %v229 = vpop.f32.mrf.mxu0
        %v230 = vpop.f32.mrf.mxu0
        %231 = vdwg.mxu0
        %vm232 = vcmp.ge.f32.partialorder %v227, 0.0
        %v233 = vmul.f32 %v227, 0.2
        %v234 = vsel %vm232, %v227, %v233
        %v235 = vmul.f32 %v234, 0.25
        %v236 = vmul.f32 %v234, 0.5
        %238 = vrot.lane.b32.xlu0 %v236, 119
        %v239 = vpop.permute.xlu0 %238
        %v241 = vadd.f32 %v235, %v239
        %243 = vrot.lane.b32.xlu0 %v235, 127
        %v244 = vpop.permute.xlu0 %243
        %v246 = vadd.f32 %v241, %v244
        %vm247 = vcmask 64512
        %248 = vst.msk [vmem:[%s163] sm:$0xff] %vm247, %v246
        %s249 = sand.u32 %s93, 1
        %s250 = scalar_lea.sflag [#allocation3], %s249
        %s251 = sand.u32 %s93, 1
        %s252 = smul.addr %s251, 8
        %s253 = scalar_lea.vmem [#allocation2], %s252
        // Predicated region
        $region33: #{tpu_custom_call.1} parent=31 // pred_check
          %p254 = pneg %p103
        $region34: #{tpu_custom_call.1} parent=31 // pred_check_branch
          %256 = sbr.rel (%p254) target = $region36
        $region35: #{tpu_custom_call.1} parent=31 // pred_region
          %s258 = ssub.s32 128, 128
          %259 = vsyncadd %s250, %s258
          %s260 = smul.addr %s17, 128
          %s261 = scalar_lea.hbm %s3, %s260
          %s263 = sshll.u32 %s253, 4
          %s264 = int_to_ptr.vmem [resolvable:$true] %s263
          %266 = dma.vmem_to_hbm [thread:$0]  %s264, 128, %s261, %s250
        $region36: #{tpu_custom_call.1} parent=31 // pred_fallthru
          _
      $region32: #{tpu_custom_call.1} parent=5 // pred_fallthru
        _
      %p267 = scmp.le.s32.totalorder 2, %s12
      // Predicated region
      $region37: #{tpu_custom_call.1} parent=5 // pred_check
        %p268 = pneg %p267
      $region38: #{tpu_custom_call.1} parent=5 // pred_check_branch
        %270 = sbr.rel (%p268) target = $region40
      $region39: #{tpu_custom_call.1} parent=5 // pred_region
        %s271 = ssub.s32 %s12, 2
        // Predicated region
        $region41: #{tpu_custom_call.1} parent=39 // pred_check
          %p272 = pneg %p109
        $region42: #{tpu_custom_call.1} parent=39 // pred_check_branch
          %274 = sbr.rel (%p272) target = $region44
        $region43: #{tpu_custom_call.1} parent=39 // pred_region
          %s275 = sand.u32 %s94, 1
          %s276 = scalar_lea.sflag [#allocation3], %s275
          %s277 = sand.u32 %s94, 1
          %s278 = smul.addr %s277, 8
          %s279 = scalar_lea.vmem [#allocation2], %s278
          %280 = dma.done %s276, 128
        $region44: #{tpu_custom_call.1} parent=39 // pred_fallthru
          _
      $region40: #{tpu_custom_call.1} parent=5 // pred_fallthru
        _
    $region6: #{tpu_custom_call.1} parent=1 // loop_footer
      %s16 = sadd.s32 1, %s12
    $region7: #{tpu_custom_call.1} parent=1 // loop_footer_branch
      %11 = sbr.rel target = $region3
    $region8: #{tpu_custom_call.1} parent=1 // loop_exit
      _
    %281 = vsyncpa [#allocation3], 1
    %s282 = scalar_lea.sflag [#allocation3], 1
    %283 = vsyncpa %s282, 1

</llo_original>
